<compile_context>
chip_gen: v7x
topology: tpu7x:2x2x1
jax: 0.10.0
libtpu: 0.0.40
codegen_flags: <defaults>
</compile_context>

<pallas_src>
import jax
import jax.numpy as jnp
from jax import lax
from jax.experimental import pallas as pl
from jax.experimental.pallas import tpu as pltpu


def _round_up(x, m):
    return ((x + m - 1) // m) * m


def _vmem_budget_bytes():
    """~70% of the physical per-core VMEM (128 MiB v5e/v6e, 64 MiB v7x)."""
    try:
        cap = int(pltpu.get_tpu_info().vmem_capacity_bytes)
    except Exception:
        cap = 64 << 20          # conservative fallback = v7x per-TC capacity
    return int(cap * 0.70)


def _pick_label_block(L, Td_p, Te_p, Dd_p, De_p, in_isz, out_isz, budget):
    """Largest label block tl whose per-step working set (double-buffered
    inputs/outputs + the staged intermediate scratch) fits the VMEM budget."""
    act = (Td_p * Dd_p + De_p * Te_p) * in_isz + (Td_p + Te_p) * 4   # xd, xeT, masks
    best = 1
    for tl in range(1, L + 1):
        u_b = Dd_p * tl * De_p * in_isz           # U block
        o_b = tl * Td_p * Te_p * out_isz          # output block
        tmp_b = Td_p * tl * De_p * in_isz         # staged intermediate (single buffer)
        if 2 * (u_b + o_b + act) + tmp_b <= budget:
            best = tl
    return best


def _make_kernel(tl, de_p, has_mask):
    def compute(d_ref, eT_ref, u_ref, md_ref, me_ref, o_ref, tmp_ref):
        xd = d_ref[0]                 # (Td_p, Dd_p)  augmented decoder input
        xeT = eT_ref[0]               # (De_p, Te_p)  augmented, pre-transposed encoder

        # One wide MXU matmul covering all tl labels of this block; stage the
        # result in VMEM scratch so it does not live in vregs across the loop.
        tmp_ref[...] = jnp.dot(
            xd, u_ref[0], preferred_element_type=jnp.float32
        ).astype(tmp_ref.dtype)

        @pl.loop(0, tl)
        def _(l):
            start = pl.multiple_of(l * de_p, 128)          # 128-aligned lane slice
            t_l = tmp_ref[:, pl.ds(start, de_p)]           # (Td_p, De_p)
            s = jnp.dot(t_l, xeT, preferred_element_type=jnp.float32)  # (Td_p, Te_p)
            if has_mask:
                s = s * md_ref[0] * me_ref[0]              # (Td_p,1)*(1,Te_p) broadcast
            o_ref[0, pl.ds(l, 1)] = s[None].astype(o_ref.dtype)

    if has_mask:
        def kernel(d_ref, eT_ref, u_ref, md_ref, me_ref, o_ref, tmp_ref):
            compute(d_ref, eT_ref, u_ref, md_ref, me_ref, o_ref, tmp_ref)
    else:
        def kernel(d_ref, eT_ref, u_ref, o_ref, tmp_ref):
            compute(d_ref, eT_ref, u_ref, None, None, o_ref, tmp_ref)
    return kernel


def biattention(input_e, input_d, W_e, W_d, b, U=None, mask_d=None, mask_e=None,
                *, biaffine=True, label_block=None, compute_dtype=None,
                out_dtype=jnp.float32):
    """Pallas BiAttention forward.

    input_e: (B, Te, De)   input_d: (B, Td, Dd)
    W_e: (L, De)  W_d: (L, Dd)  b: (L, 1, 1)  U: (L, Dd, De)
    mask_d: (B, Td) or None, mask_e: (B, Te) or None
    returns: (B, L, Td, Te) in out_dtype (biaffine=True).
    """
    B, Td, Dd = input_d.shape
    Be, Te, De = input_e.shape
    assert B == Be
    L = W_d.shape[0]

    if not biaffine:
        # TODO(synk): the non-biaffine branch (out_d + out_d + b) is pure
        # broadcast adds — left to plain XLA, no Pallas kernel warranted.
        out_d = jnp.einsum('ld,btd->blt', W_d.astype(jnp.float32),
                           input_d.astype(jnp.float32))[..., None]
        out = (out_d + out_d + b.astype(jnp.float32)[None]).astype(out_dtype)
        if mask_d is not None:
            out = out * mask_d[:, None, :, None].astype(out.dtype)
        if mask_e is not None:
            out = out * mask_e[:, None, None, :].astype(out.dtype)
        return out

    # bf16 is the MXU-native path on v5e/v6e/v7x; f32 accumulation is kept via
    # preferred_element_type.  Pass jnp.float32 for full operand precision.
    cdt = jnp.bfloat16 if compute_dtype is None else compute_dtype
    in_isz = jnp.dtype(cdt).itemsize
    out_isz = jnp.dtype(out_dtype).itemsize

    # Padded / augmented feature sizes: +1 column of ones folds the linear and
    # bias terms into the biaffine matmul; lane axis padded to 128 so the
    # per-label lane slices of the intermediate are 128-aligned; sublane axis
    # padded to the dtype sublane tile (8 f32 / 16 bf16).  NOTE: for narrow De
    # (De+1 << 128) this padding multiplies first-matmul work and U bytes.
    sub = 32 // in_isz
    Dd_p = _round_up(Dd + 1, sub)
    De_p = _round_up(De + 1, 128)
    Td_p = _round_up(Td, 8)
    Te_p = _round_up(Te, 128)     # lane-dense output stores (full vst, no vst.msk)

    budget = _vmem_budget_bytes()
    tl = (label_block if label_block is not None
          else _pick_label_block(L, Td_p, Te_p, Dd_p, De_p, in_isz, out_isz, budget))
    L_p = _round_up(L, tl)        # pad labels so any L (even prime) works
    nL = L_p // tl

    # Augmented decoder input [x_d, 1, 0...] -> (B, Td_p, Dd_p)
    xd_aug = jnp.zeros((B, Td_p, Dd_p), cdt)
    xd_aug = xd_aug.at[:, :Td, :Dd].set(input_d.astype(cdt))
    xd_aug = xd_aug.at[:, :Td, Dd].set(1.0)

    # Augmented + pre-transposed encoder input -> (B, De_p, Te_p)
    xeT_aug = jnp.zeros((B, De_p, Te_p), cdt)
    xeT_aug = xeT_aug.at[:, :De, :Te].set(jnp.transpose(input_e, (0, 2, 1)).astype(cdt))
    xeT_aug = xeT_aug.at[:, De, :Te].set(1.0)

    # Augmented biaffine tensor U_aug[l] = [[U[l], W_d[l]], [W_e[l], b[l]]],
    # pre-blocked as (nL, Dd_p, tl*De_p) so each grid step's U DMA is one
    # contiguous transfer.  Padded labels are all-zero -> zero scores, sliced off.
    # TODO(synk): when parameters are static across calls, hoist this repack
    # (and the xeT transpose) out of the per-call path / cache it under jit.
    U_aug = jnp.zeros((L_p, Dd_p, De_p), cdt)
    U_aug = U_aug.at[:L, :Dd, :De].set(U.astype(cdt))
    U_aug = U_aug.at[:L, :Dd, De].set(W_d.astype(cdt))
    U_aug = U_aug.at[:L, Dd, :De].set(W_e.astype(cdt))
    U_aug = U_aug.at[:L, Dd, De].set(b.reshape(L).astype(cdt))
    U_blocks = (U_aug.reshape(nL, tl, Dd_p, De_p)
                     .transpose(0, 2, 1, 3)
                     .reshape(nL, Dd_p, tl * De_p))

    has_mask = (mask_d is not None) or (mask_e is not None)
    if has_mask:
        md = (jnp.ones((B, Td), jnp.float32) if mask_d is None
              else mask_d.astype(jnp.float32))
        me = (jnp.ones((B, Te), jnp.float32) if mask_e is None
              else mask_e.astype(jnp.float32))
        md3 = jnp.zeros((B, Td_p, 1), jnp.float32).at[:, :Td, 0].set(md)
        me3 = jnp.zeros((B, 1, Te_p), jnp.float32).at[:, 0, :Te].set(me)

    # Grid ordering: re-fetch the *smaller* operand on the inner axis.  With
    # batch outermost, U is re-streamed B times; with labels outermost, the
    # activations are re-streamed nL times.
    u_block_bytes = Dd_p * tl * De_p * in_isz
    act_block_bytes = (Td_p * Dd_p + De_p * Te_p) * in_isz
    batch_outer = u_block_bytes <= act_block_bytes
    if batch_outer:
        grid = (B, nL)
        b_of = lambda g0, g1: g0
        l_of = lambda g0, g1: g1
    else:
        grid = (nL, B)
        b_of = lambda g0, g1: g1
        l_of = lambda g0, g1: g0

    in_specs = [
        pl.BlockSpec((1, Td_p, Dd_p), lambda g0, g1: (b_of(g0, g1), 0, 0)),       # xd_aug
        pl.BlockSpec((1, De_p, Te_p), lambda g0, g1: (b_of(g0, g1), 0, 0)),       # xeT_aug
        pl.BlockSpec((1, Dd_p, tl * De_p), lambda g0, g1: (l_of(g0, g1), 0, 0)),  # U block
    ]
    inputs = [xd_aug, xeT_aug, U_blocks]
    if has_mask:
        in_specs += [
            pl.BlockSpec((1, Td_p, 1), lambda g0, g1: (b_of(g0, g1), 0, 0)),
            pl.BlockSpec((1, 1, Te_p), lambda g0, g1: (b_of(g0, g1), 0, 0)),
        ]
        inputs += [md3, me3]

    out_spec = pl.BlockSpec((1, tl, Td_p, Te_p),
                            lambda g0, g1: (b_of(g0, g1), l_of(g0, g1), 0, 0))

    flops = 2 * B * L_p * Td_p * De_p * (Dd_p + Te_p)
    bytes_accessed = (xd_aug.size * in_isz + xeT_aug.size * in_isz
                      + U_blocks.size * in_isz + B * L_p * Td_p * Te_p * out_isz)
    if has_mask:
        bytes_accessed += md3.size * 4 + me3.size * 4

    kernel = _make_kernel(tl, De_p, has_mask)

    out = pl.pallas_call(
        kernel,
        out_shape=jax.ShapeDtypeStruct((B, L_p, Td_p, Te_p), out_dtype),
        grid=grid,
        in_specs=in_specs,
        out_specs=out_spec,
        scratch_shapes=[pltpu.VMEM((Td_p, tl * De_p), cdt)],
        compiler_params=pltpu.CompilerParams(
            dimension_semantics=("parallel", "parallel"),
            vmem_limit_bytes=int(budget)),
        cost_estimate=pl.CostEstimate(
            flops=int(flops), transcendentals=0, bytes_accessed=int(bytes_accessed)),
    )(*inputs)

    if (L_p, Td_p, Te_p) != (L, Td, Te):
        out = out[:, :L, :Td, :Te]
    return out


def _reference(input_e, input_d, W_e, W_d, b, U, mask_d=None, mask_e=None):
    # Pure-JAX mirror of the PyTorch forward (biaffine=True).
    out_d = jnp.einsum('ld,btd->blt', W_d, input_d)[..., None]        # (B,L,Td,1)
    out_e = jnp.einsum('le,bse->bls', W_e, input_e)[:, :, None, :]    # (B,L,1,Te)
    tmp = jnp.einsum('btd,lde->blte', input_d, U)                     # (B,L,Td,De)
    out = jnp.einsum('blte,bse->blts', tmp, input_e)                  # (B,L,Td,Te)
    out = out + out_d + out_e + b[None]
    if mask_d is not None:
        out = out * mask_d[:, None, :, None] * mask_e[:, None, None, :]
    return out


def _xavier_uniform(key, shape, fan_in, fan_out, dtype=jnp.float32):
    bound = (6.0 / (fan_in + fan_out)) ** 0.5
    return jax.random.uniform(key, shape, dtype, minval=-bound, maxval=bound)


if __name__ == "__main__":
    # Small shapes consistent with the module: batch=2, seq=8, hidden=32, labels=4.
    B, Td, Te, Dd, De, L = 2, 8, 8, 32, 32, 4

    key = jax.random.PRNGKey(0)
    k_e, k_d, k_we, k_wd, k_u = jax.random.split(key, 5)

    input_e = jax.random.normal(k_e, (B, Te, De), jnp.float32)
    input_d = jax.random.normal(k_d, (B, Td, Dd), jnp.float32)

    # Deterministic parameter init (mirrors xavier_uniform_ / constant_(0)).
    W_e = _xavier_uniform(k_we, (L, De), fan_in=De, fan_out=L)
    W_d = _xavier_uniform(k_wd, (L, Dd), fan_in=Dd, fan_out=L)
    bias = jnp.zeros((L, 1, 1), jnp.float32)
    U = _xavier_uniform(k_u, (L, Dd, De), fan_in=Dd * De, fan_out=L * De)

    # Deterministic 0/1 masks.
    mask_d = (jnp.arange(Td)[None, :] < jnp.array([[Td], [Td - 2]])).astype(jnp.float32)
    mask_e = (jnp.arange(Te)[None, :] < jnp.array([[Te - 1], [Te]])).astype(jnp.float32)

    ref = _reference(input_e, input_d, W_e, W_d, bias, U, mask_d, mask_e)
    ref_nm = _reference(input_e, input_d, W_e, W_d, bias, U)
    scale = float(jnp.max(jnp.abs(ref))) + 1e-6

    # f32 compute path — tight tolerance.
    out_f32 = jax.block_until_ready(
        biattention(input_e, input_d, W_e, W_d, bias, U, mask_d, mask_e,
                    compute_dtype=jnp.float32))
    assert out_f32.shape == (B, L, Td, Te), out_f32.shape
    assert jnp.allclose(out_f32, ref, atol=2e-4, rtol=2e-4), \
        float(jnp.max(jnp.abs(out_f32 - ref)))

    # Default bf16-compute path (MXU-native) — loose tolerance (accuracy knob).
    out_bf16 = jax.block_until_ready(
        biattention(input_e, input_d, W_e, W_d, bias, U, mask_d, mask_e))
    assert float(jnp.max(jnp.abs(out_bf16 - ref))) <= 0.03 * scale + 1e-3, \
        float(jnp.max(jnp.abs(out_bf16 - ref)))

    # No-mask variant (mask multiply compiled out), f32 compute.
    out_nm = jax.block_until_ready(
        biattention(input_e, input_d, W_e, W_d, bias, U, compute_dtype=jnp.float32))
    assert jnp.allclose(out_nm, ref_nm, atol=2e-4, rtol=2e-4), \
        float(jnp.max(jnp.abs(out_nm - ref_nm)))

    print("KERNEL_OK")
</pallas_src>

<mosaic_0001>
module attributes {stable_mosaic.version = 11 : i64} {
  func.func @kernel(%arg0: i32, %arg1: i32, %arg2: memref<1x8x40xf32, #tpu.memory_space<vmem>>, %arg3: memref<1x128x128xf32, #tpu.memory_space<vmem>>, %arg4: memref<1x40x512xf32, #tpu.memory_space<vmem>>, %arg5: memref<1x8x1xf32, #tpu.memory_space<vmem>>, %arg6: memref<1x1x128xf32, #tpu.memory_space<vmem>>, %arg7: memref<1x4x8x128xf32, #tpu.memory_space<vmem>>, %arg8: memref<8x512xf32, #tpu.memory_space<vmem>>) attributes {dimension_semantics = [#tpu.dimension_semantics<parallel>, #tpu.dimension_semantics<parallel>], iteration_bounds = array<i64: 1, 2>, scalar_prefetch = 0 : i64, scratch_operands = 1 : i64, tpu.core_type = #tpu.core_type<tc>, window_params = [{transform_indices = @transform_0, window_bounds = array<i64: 1, 8, 40>}, {transform_indices = @transform_1, window_bounds = array<i64: 1, 128, 128>}, {transform_indices = @transform_2, window_bounds = array<i64: 1, 40, 512>}, {transform_indices = @transform_3, window_bounds = array<i64: 1, 8, 1>}, {transform_indices = @transform_4, window_bounds = array<i64: 1, 1, 128>}, {transform_indices = @transform_5, window_bounds = array<i64: 1, 4, 8, 128>}]} {
    %c0 = arith.constant 0 : index
    %c0_0 = arith.constant 0 : index
    %c0_1 = arith.constant 0 : index
    %0 = vector.load %arg2[%c0, %c0_0, %c0_1] : memref<1x8x40xf32, #tpu.memory_space<vmem>>, vector<1x8x40xf32>
    %1 = vector.shape_cast %0 : vector<1x8x40xf32> to vector<8x40xf32>
    %c0_2 = arith.constant 0 : index
    %c0_3 = arith.constant 0 : index
    %c0_4 = arith.constant 0 : index
    %2 = vector.load %arg3[%c0_2, %c0_3, %c0_4] : memref<1x128x128xf32, #tpu.memory_space<vmem>>, vector<1x128x128xf32>
    %3 = vector.shape_cast %2 : vector<1x128x128xf32> to vector<128x128xf32>
    %c0_5 = arith.constant 0 : index
    %c0_6 = arith.constant 0 : index
    %c0_7 = arith.constant 0 : index
    %4 = vector.load %arg4[%c0_5, %c0_6, %c0_7] : memref<1x40x512xf32, #tpu.memory_space<vmem>>, vector<1x40x512xf32>
    %5 = vector.shape_cast %4 : vector<1x40x512xf32> to vector<40x512xf32>
    %cst = arith.constant dense<0.000000e+00> : vector<8x512xf32>
    %6 = tpu.matmul %1, %5, %cst {dimension_numbers = #tpu.dot_dimension_numbers<[1], [0], [0], [1], [0, 0, 1, 1], [], []>} : vector<8x40xf32>, vector<40x512xf32>, vector<8x512xf32> -> vector<8x512xf32>
    %c0_8 = arith.constant 0 : index
    %c0_9 = arith.constant 0 : index
    %7 = vector.load %arg8[%c0_8, %c0_9] : memref<8x512xf32, #tpu.memory_space<vmem>>, vector<8x512xf32>
    tpu.vector_store %arg8[%c0_8, %c0_9], %6 {strides = array<i32>} : memref<8x512xf32, #tpu.memory_space<vmem>>, vector<8x512xf32>,
    %c0_i32 = arith.constant 0 : i32
    %c4_i32 = arith.constant 4 : i32
    %8 = arith.addi %c0_i32, %c4_i32 : i32
    %c1_i32 = arith.constant 1 : i32
    scf.for %arg9 = %c0_i32 to %8 step %c1_i32  : i32 {
      %c1_i32_11 = arith.constant 1 : i32
      %9 = arith.muli %arg9, %c1_i32_11 : i32
      %c0_i32_12 = arith.constant 0 : i32
      %10 = arith.addi %c0_i32_12, %9 : i32
      %c128_i32 = arith.constant 128 : i32
      %11 = arith.muli %10, %c128_i32 : i32
      %12 = tpu.assume_multiple %11, 128 : i32
      %c0_13 = arith.constant 0 : index
      %13 = arith.index_cast %12 : i32 to index
      %14 = vector.load %arg8[%c0_13, %13] : memref<8x512xf32, #tpu.memory_space<vmem>>, vector<8x128xf32>
      %cst_14 = arith.constant dense<0.000000e+00> : vector<8x128xf32>
      %15 = tpu.matmul %14, %3, %cst_14 {dimension_numbers = #tpu.dot_dimension_numbers<[1], [0], [0], [1], [0, 0, 1, 1], [], []>} : vector<8x128xf32>, vector<128x128xf32>, vector<8x128xf32> -> vector<8x128xf32>
      %c0_15 = arith.constant 0 : index
      %c0_16 = arith.constant 0 : index
      %c0_17 = arith.constant 0 : index
      %16 = vector.load %arg5[%c0_15, %c0_16, %c0_17] : memref<1x8x1xf32, #tpu.memory_space<vmem>>, vector<1x8x1xf32>
      %17 = vector.shape_cast %16 : vector<1x8x1xf32> to vector<8x1xf32>
      %18 = vector.broadcast %17 : vector<8x1xf32> to vector<8x128xf32>
      %19 = arith.mulf %15, %18 : vector<8x128xf32>
      %c0_18 = arith.constant 0 : index
      %c0_19 = arith.constant 0 : index
      %c0_20 = arith.constant 0 : index
      %20 = vector.load %arg6[%c0_18, %c0_19, %c0_20] : memref<1x1x128xf32, #tpu.memory_space<vmem>>, vector<1x1x128xf32>
      %21 = vector.shape_cast %20 : vector<1x1x128xf32> to vector<1x128xf32>
      %22 = vector.broadcast %21 : vector<1x128xf32> to vector<8x128xf32>
      %23 = arith.mulf %19, %22 : vector<8x128xf32>
      %24 = vector.shape_cast %23 : vector<8x128xf32> to vector<1x8x128xf32>
      %c0_21 = arith.constant 0 : index
      %25 = arith.index_cast %10 : i32 to index
      %c0_22 = arith.constant 0 : index
      %c0_23 = arith.constant 0 : index
      %26 = vector.load %arg7[%c0_21, %25, %c0_22, %c0_23] : memref<1x4x8x128xf32, #tpu.memory_space<vmem>>, vector<1x1x8x128xf32>
      %27 = vector.shape_cast %26 : vector<1x1x8x128xf32> to vector<1x8x128xf32>
      %28 = vector.shape_cast %24 : vector<1x8x128xf32> to vector<1x1x8x128xf32>
      tpu.vector_store %arg7[%c0_21, %25, %c0_22, %c0_23], %28 {strides = array<i32>} : memref<1x4x8x128xf32, #tpu.memory_space<vmem>>, vector<1x1x8x128xf32>,
    }
    %c4_i32_10 = arith.constant 4 : i32
    return
  }
  func.func @transform_0(%arg0: i32, %arg1: i32) -> (i32, i32, i32) {
    %c0_i32 = arith.constant 0 : i32
    %c0_i32_0 = arith.constant 0 : i32
    %c0_i32_1 = arith.constant 0 : i32
    return %arg1, %c0_i32, %c0_i32_0 : i32, i32, i32
  }
  func.func @transform_1(%arg0: i32, %arg1: i32) -> (i32, i32, i32) {
    %c0_i32 = arith.constant 0 : i32
    %c0_i32_0 = arith.constant 0 : i32
    %c0_i32_1 = arith.constant 0 : i32
    return %arg1, %c0_i32, %c0_i32_0 : i32, i32, i32
  }
  func.func @transform_2(%arg0: i32, %arg1: i32) -> (i32, i32, i32) {
    %c0_i32 = arith.constant 0 : i32
    %c0_i32_0 = arith.constant 0 : i32
    %c0_i32_1 = arith.constant 0 : i32
    return %arg0, %c0_i32, %c0_i32_0 : i32, i32, i32
  }
  func.func @transform_3(%arg0: i32, %arg1: i32) -> (i32, i32, i32) {
    %c0_i32 = arith.constant 0 : i32
    %c0_i32_0 = arith.constant 0 : i32
    %c0_i32_1 = arith.constant 0 : i32
    return %arg1, %c0_i32, %c0_i32_0 : i32, i32, i32
  }
  func.func @transform_4(%arg0: i32, %arg1: i32) -> (i32, i32, i32) {
    %c0_i32 = arith.constant 0 : i32
    %c0_i32_0 = arith.constant 0 : i32
    %c0_i32_1 = arith.constant 0 : i32
    return %arg1, %c0_i32, %c0_i32_0 : i32, i32, i32
  }
  func.func @transform_5(%arg0: i32, %arg1: i32) -> (i32, i32, i32, i32) {
    %c0_i32 = arith.constant 0 : i32
    %c0_i32_0 = arith.constant 0 : i32
    %c0_i32_1 = arith.constant 0 : i32
    return %arg1, %arg0, %c0_i32, %c0_i32_0 : i32, i32, i32, i32
  }
}

</mosaic_0001>

<llo_original>
// kernel: tpu_custom_call.1
$region0: #{tpu_custom_call.1}
  #allocation0 [shape = 'u32[]', space=smem, size = 0x4, offset = 0x4, fixed_abs, tag = 'smem constant byte address 0x4 - core index']
  #allocation1 [shape = 'u32[144,128]{1,0:T(1,128)}', space=vmem, size = 0x12000, scoped, tag = 'internal scratch']
  #allocation2 [shape = 'f32[8,512]{1,0:T(8,128)}', space=vmem, size = 0x4000, scoped, tag = 'scratch operand']
  %s0 = inlined_call_operand.vmem [shape: f32[2,8,40], index: 0, kind: input, shape index: {}]
  %s1 = inlined_call_operand.hbm [shape: f32[2,128,128], index: 1, kind: input, shape index: {}]
  %s2 = inlined_call_operand.hbm [shape: f32[1,40,512], index: 2, kind: input, shape index: {}]
  %s3 = inlined_call_operand.vmem [shape: f32[2,8,1], index: 3, kind: input, shape index: {}]
  %s4 = inlined_call_operand.vmem [shape: f32[2,1,128], index: 4, kind: input, shape index: {}]
  %s5 = inlined_call_operand.hbm [shape: f32[2,4,8,128], index: 5, kind: output, shape index: {}]
  %s6 = sld [smem:[#allocation0]]
  $region68: #{tpu_custom_call.1} parent=0
    _
  %s8 = ssub.s32 1, %s6
  %s9 = scalar_select 0, %s8, %s6
  $region1: #{tpu_custom_call.1} parent=0
    #allocation3 [shape = 'u8[131072]{0}', space=vmem, size = 0x20000, scoped, tag = 'input window, operand 1']
    #allocation4 [shape = 's32[2]{0}', space=sflag, size = 0x8, scoped, tag = 'scoped memory for tpu_custom_call.1']
    #allocation5 [shape = 's32[2]{0}', space=sflag, size = 0x8, scoped, tag = 'scoped memory for tpu_custom_call.1']
    #allocation6 [shape = 'u8[81920]{0}', space=vmem, size = 0x14000, scoped, tag = 'input window, operand 2, single buffered']
    #allocation7 [shape = 's32[1]{0}', space=sflag, size = 0x4, scoped, tag = 'scoped memory for tpu_custom_call.1']
    #allocation8 [shape = 'u8[32768]{0}', space=vmem, size = 0x8000, scoped, tag = 'output window, operand 0']
    %10 = vsyncpa [#allocation4], 0
    %s11 = scalar_lea.sflag [#allocation4], 1
    %12 = vsyncpa %s11, 0
    %13 = vsyncpa [#allocation7], 0
    %14 = vsyncpa [#allocation5], 0
    %s15 = scalar_lea.sflag [#allocation5], 1
    %16 = vsyncpa %s15, 0
    loop: start=0, step=1, limit=4
    $region2: #{tpu_custom_call.1} parent=1 // loop_pre_header
      _
    $region3: #{tpu_custom_call.1} parent=1 // loop_header
      %s18 = sphi 0, %s22
      %p19 = scmp.ge.s32.totalorder %s18, 4
      %s25 = sphi 0, %s37
      %s26 = sphi 0, %s33
      %s27 = sphi 0, %s25
      %s28 = sphi 0, %s26
      %s29 = sphi 0, %s27
      %s30 = sphi 0, %s28
      %s40 = sphi 0, %s42
      %s43 = sphi 0, %s40
      %s44 = sphi 0, %s43
      %s60 = sphi 0, %s44
      %s66 = sphi 0, %s68
      %s69 = sphi 0, %s66
      %s70 = sphi 0, %s69
      %s86 = sphi 0, %s70
      %s92 = sphi 0, %s94
      %s95 = sphi 0, %s92
      %s96 = sphi 0, %s95
      %s112 = sphi 0, %s96
      %s118 = sphi 0, %s120
      %s121 = sphi 0, %s118
      %s122 = sphi 0, %s121
      %s138 = sphi 0, %s122
      %s144 = sphi 0, %s146
      %s147 = sphi 0, %s144
      %s148 = sphi 0, %s147
      %s164 = sphi 0, %s148
      %s172 = sphi 0, %s174
      %s175 = sphi 0, %s172
      %s176 = sphi 0, %s175
      %s192 = sphi 0, %s176
    $region4: #{tpu_custom_call.1} parent=1 // loop_header_branch
      %21 = sbr.rel (%p19) target = $region8
    $region5: #{tpu_custom_call.1} parent=1 // loop_body
      %s23 = ssub.s32 %s18, 1
      %s24 = ssub.s32 %s18, 2
      %s31 = sadd.s32 1, %s26
      %p32 = scmp.ge.s32.totalorder %s31, 2
      %s33 = scalar_select %p32, 0, %s31
      %s34 = sadd.s32 1, %s25
      %s35 = scalar_select %p32, %s34, %s25
      %p36 = scmp.ge.s32.totalorder %s35, 1
      %s37 = scalar_select %p36, 0, %s35
      %s38 = ssub.s32 %s26, %s33
      %p39 = scmp.eq.s32.totalorder %s38, 0
      %s41 = sadd.s32 %s40, 1
      %s42 = scalar_select %p39, %s40, %s41
      %p45 = pneg %p39
      %p46 = scmp.eq.s32.totalorder %s18, 1
      %p47 = por %p45, %p46
      %p48 = scmp.ne.s32.totalorder %s40, %s43
      %p49 = scmp.eq.s32.totalorder %s18, 0
      %p50 = por %p48, %p49
      %p51 = scmp.ne.s32.totalorder %s40, %s43
      %p52 = scmp.eq.s32.totalorder %s23, 1
      %p53 = por %p51, %p52
      %p54 = scmp.ne.s32.totalorder %s43, %s44
      %p55 = scmp.eq.s32.totalorder %s23, 0
      %p56 = por %p54, %p55
      %p57 = scmp.ne.s32.totalorder %s43, %s44
      %p58 = scmp.eq.s32.totalorder %s24, 1
      %p59 = por %p57, %p58
      %p61 = scmp.ne.s32.totalorder %s44, %s60
      %p62 = scmp.eq.s32.totalorder %s24, 0
      %p63 = por %p61, %p62
      %s64 = ssub.s32 %s26, %s33
      %p65 = scmp.eq.s32.totalorder %s64, 0
      %s67 = sadd.s32 %s66, 1
      %s68 = scalar_select %p65, %s66, %s67
      %p71 = pneg %p65
      %p72 = scmp.eq.s32.totalorder %s18, 1
      %p73 = por %p71, %p72
      %p74 = scmp.ne.s32.totalorder %s66, %s69
      %p75 = scmp.eq.s32.totalorder %s18, 0
      %p76 = por %p74, %p75
      %p77 = scmp.ne.s32.totalorder %s66, %s69
      %p78 = scmp.eq.s32.totalorder %s23, 1
      %p79 = por %p77, %p78
      %p80 = scmp.ne.s32.totalorder %s69, %s70
      %p81 = scmp.eq.s32.totalorder %s23, 0
      %p82 = por %p80, %p81
      %p83 = scmp.ne.s32.totalorder %s69, %s70
      %p84 = scmp.eq.s32.totalorder %s24, 1
      %p85 = por %p83, %p84
      %p87 = scmp.ne.s32.totalorder %s70, %s86
      %p88 = scmp.eq.s32.totalorder %s24, 0
      %p89 = por %p87, %p88
      %s90 = ssub.s32 %s25, %s37
      %p91 = scmp.eq.s32.totalorder %s90, 0
      %s93 = sadd.s32 %s92, 1
      %s94 = scalar_select %p91, %s92, %s93
      %p97 = pneg %p91
      %p98 = scmp.eq.s32.totalorder %s18, 1
      %p99 = por %p97, %p98
      %p100 = scmp.ne.s32.totalorder %s92, %s95
      %p101 = scmp.eq.s32.totalorder %s18, 0
      %p102 = por %p100, %p101
      %p103 = scmp.ne.s32.totalorder %s92, %s95
      %p104 = scmp.eq.s32.totalorder %s23, 1
      %p105 = por %p103, %p104
      %p106 = scmp.ne.s32.totalorder %s95, %s96
      %p107 = scmp.eq.s32.totalorder %s23, 0
      %p108 = por %p106, %p107
      %p109 = scmp.ne.s32.totalorder %s95, %s96
      %p110 = scmp.eq.s32.totalorder %s24, 1
      %p111 = por %p109, %p110
      %p113 = scmp.ne.s32.totalorder %s96, %s112
      %p114 = scmp.eq.s32.totalorder %s24, 0
      %p115 = por %p113, %p114
      %s116 = ssub.s32 %s26, %s33
      %p117 = scmp.eq.s32.totalorder %s116, 0
      %s119 = sadd.s32 %s118, 1
      %s120 = scalar_select %p117, %s118, %s119
      %p123 = pneg %p117
      %p124 = scmp.eq.s32.totalorder %s18, 1
      %p125 = por %p123, %p124
      %p126 = scmp.ne.s32.totalorder %s118, %s121
      %p127 = scmp.eq.s32.totalorder %s18, 0
      %p128 = por %p126, %p127
      %p129 = scmp.ne.s32.totalorder %s118, %s121
      %p130 = scmp.eq.s32.totalorder %s23, 1
      %p131 = por %p129, %p130
      %p132 = scmp.ne.s32.totalorder %s121, %s122
      %p133 = scmp.eq.s32.totalorder %s23, 0
      %p134 = por %p132, %p133
      %p135 = scmp.ne.s32.totalorder %s121, %s122
      %p136 = scmp.eq.s32.totalorder %s24, 1
      %p137 = por %p135, %p136
      %p139 = scmp.ne.s32.totalorder %s122, %s138
      %p140 = scmp.eq.s32.totalorder %s24, 0
      %p141 = por %p139, %p140
      %s142 = ssub.s32 %s26, %s33
      %p143 = scmp.eq.s32.totalorder %s142, 0
      %s145 = sadd.s32 %s144, 1
      %s146 = scalar_select %p143, %s144, %s145
      %p149 = pneg %p143
      %p150 = scmp.eq.s32.totalorder %s18, 1
      %p151 = por %p149, %p150
      %p152 = scmp.ne.s32.totalorder %s144, %s147
      %p153 = scmp.eq.s32.totalorder %s18, 0
      %p154 = por %p152, %p153
      %p155 = scmp.ne.s32.totalorder %s144, %s147
      %p156 = scmp.eq.s32.totalorder %s23, 1
      %p157 = por %p155, %p156
      %p158 = scmp.ne.s32.totalorder %s147, %s148
      %p159 = scmp.eq.s32.totalorder %s23, 0
      %p160 = por %p158, %p159
      %p161 = scmp.ne.s32.totalorder %s147, %s148
      %p162 = scmp.eq.s32.totalorder %s24, 1
      %p163 = por %p161, %p162
      %p165 = scmp.ne.s32.totalorder %s148, %s164
      %p166 = scmp.eq.s32.totalorder %s24, 0
      %p167 = por %p165, %p166
      %s168 = ssub.s32 %s26, %s33
      %s169 = ssub.s32 %s25, %s37
      %s170 = sor.u32 %s168, %s169
      %p171 = scmp.eq.s32.totalorder %s170, 0
      %s173 = sadd.s32 %s172, 1
      %s174 = scalar_select %p171, %s172, %s173
      %p177 = pneg %p171
      %p178 = scmp.eq.s32.totalorder %s18, 1
      %p179 = por %p177, %p178
      %p180 = scmp.ne.s32.totalorder %s172, %s175
      %p181 = scmp.eq.s32.totalorder %s18, 0
      %p182 = por %p180, %p181
      %p183 = scmp.ne.s32.totalorder %s172, %s175
      %p184 = scmp.eq.s32.totalorder %s23, 1
      %p185 = por %p183, %p184
      %p186 = scmp.ne.s32.totalorder %s175, %s176
      %p187 = scmp.eq.s32.totalorder %s23, 0
      %p188 = por %p186, %p187
      %p189 = scmp.ne.s32.totalorder %s175, %s176
      %p190 = scmp.eq.s32.totalorder %s24, 1
      %p191 = por %p189, %p190
      %p193 = scmp.ne.s32.totalorder %s176, %s192
      %p194 = scmp.eq.s32.totalorder %s24, 0
      %p195 = por %p193, %p194
      %p196 = scmp.le.s32.totalorder 1, %s18
      %p197 = scmp.lt.s32.totalorder %s18, 3
      %p198 = pnand %p196, %p197
      %p199 = pneg %p198
      // Predicated region
      $region9: #{tpu_custom_call.1} parent=5 // pred_check
        _
      $region10: #{tpu_custom_call.1} parent=5 // pred_check_branch
        %201 = sbr.rel (%p198) target = $region12
      $region11: #{tpu_custom_call.1} parent=5 // pred_region
        %s202 = ssub.s32 %s18, 1
        // Predicated region
        $region13: #{tpu_custom_call.1} parent=11 // pred_check
          %p203 = pneg %p108
        $region14: #{tpu_custom_call.1} parent=11 // pred_check_branch
          %205 = sbr.rel (%p203) target = $region16
        $region15: #{tpu_custom_call.1} parent=11 // pred_region
          %s207 = ssub.s32 2560, 2560
          %208 = vsyncadd [#allocation7], %s207
          %s209 = smul.addr %s27, 20
          %s210 = smul.addr %s209, 128
          %s211 = scalar_lea.hbm %s2, %s210
          %s212 = sshll.u32 [#allocation6], 4
          %s213 = int_to_ptr.vmem [resolvable:$true] %s212
          %218 = dma.hbm_to_vmem [thread:$0]  %s211, 2560, %s213, [#allocation7], 512, 512, 32
        $region16: #{tpu_custom_call.1} parent=11 // pred_fallthru
          _
      $region12: #{tpu_custom_call.1} parent=5 // pred_fallthru
        _
      %p219 = scmp.lt.s32.totalorder %s18, 2
      // Predicated region
      $region17: #{tpu_custom_call.1} parent=5 // pred_check
        %p220 = pneg %p219
      $region18: #{tpu_custom_call.1} parent=5 // pred_check_branch
        %222 = sbr.rel (%p220) target = $region20
      $region19: #{tpu_custom_call.1} parent=5 // pred_region
        // Predicated region
        $region21: #{tpu_custom_call.1} parent=19 // pred_check
          %p223 = pneg %p50
        $region22: #{tpu_custom_call.1} parent=19 // pred_check_branch
          %225 = sbr.rel (%p223) target = $region24
        $region23: #{tpu_custom_call.1} parent=19 // pred_region
          %p226 = scmp.lt.s32.totalorder %s26, 1
          %s227 = scalar_select %p226, %s26, 1
          %s228 = smul.addr %s227, 8
          %s229 = scalar_lea.vmem %s0, %s228
        $region24: #{tpu_custom_call.1} parent=19 // pred_fallthru
          _
        // Predicated region
        $region25: #{tpu_custom_call.1} parent=19 // pred_check
          %p230 = pneg %p76
        $region26: #{tpu_custom_call.1} parent=19 // pred_check_branch
          %232 = sbr.rel (%p230) target = $region28
        $region27: #{tpu_custom_call.1} parent=19 // pred_region
          %s233 = sand.u32 %s66, 1
          %s234 = scalar_lea.sflag [#allocation4], %s233
          %s235 = sand.u32 %s66, 1
          %s236 = smul.addr %s235, 128
          %s237 = scalar_lea.vmem [#allocation3], %s236
          %s239 = ssub.s32 2048, 2048
          %240 = vsyncadd %s234, %s239
          %s241 = smul.addr %s26, 16
          %s242 = smul.addr %s241, 128
          %s243 = scalar_lea.hbm %s1, %s242
          %s244 = sshll.u32 %s237, 4
          %s245 = int_to_ptr.vmem [resolvable:$true] %s244
          %250 = dma.hbm_to_vmem [thread:$0]  %s243, 2048, %s245, %s234, 128, 128, 8
        $region28: #{tpu_custom_call.1} parent=19 // pred_fallthru
          _
        // Predicated region
        $region29: #{tpu_custom_call.1} parent=19 // pred_check
          %p251 = pneg %p128
        $region30: #{tpu_custom_call.1} parent=19 // pred_check_branch
          %253 = sbr.rel (%p251) target = $region32
        $region31: #{tpu_custom_call.1} parent=19 // pred_region
          %p254 = scmp.lt.s32.totalorder %s26, 1
          %s255 = scalar_select %p254, %s26, 1
          %s256 = smul.addr %s255, 8
          %s257 = scalar_lea.vmem %s3, %s256
        $region32: #{tpu_custom_call.1} parent=19 // pred_fallthru
          _
        // Predicated region
        $region33: #{tpu_custom_call.1} parent=19 // pred_check
          %p258 = pneg %p154
        $region34: #{tpu_custom_call.1} parent=19 // pred_check_branch
          %260 = sbr.rel (%p258) target = $region36
        $region35: #{tpu_custom_call.1} parent=19 // pred_region
          %p261 = scmp.lt.s32.totalorder %s26, 1
          %s262 = scalar_select %p261, %s26, 1
          %s263 = scalar_lea.vmem %s4, %s262
        $region36: #{tpu_custom_call.1} parent=19 // pred_fallthru
          _
      $region20: #{tpu_custom_call.1} parent=5 // pred_fallthru
        _
      %p264 = scmp.le.s32.totalorder 1, %s18
      %p265 = scmp.lt.s32.totalorder %s18, 3
      %p266 = pnand %p264, %p265
      %p267 = pneg %p266
      // Predicated region
      $region37: #{tpu_custom_call.1} parent=5 // pred_check
        _
      $region38: #{tpu_custom_call.1} parent=5 // pred_check_branch
        %269 = sbr.rel (%p266) target = $region40
      $region39: #{tpu_custom_call.1} parent=5 // pred_region
        %s270 = ssub.s32 %s18, 1
        %s271 = sand.u32 %s69, 1
        %s272 = scalar_lea.sflag [#allocation4], %s271
        %s273 = sand.u32 %s69, 1
        %s274 = smul.addr %s273, 128
        %s275 = scalar_lea.vmem [#allocation3], %s274
        // Predicated region
        $region41: #{tpu_custom_call.1} parent=39 // pred_check
          %p276 = pneg %p82
        $region42: #{tpu_custom_call.1} parent=39 // pred_check_branch
          %278 = sbr.rel (%p276) target = $region44
        $region43: #{tpu_custom_call.1} parent=39 // pred_region
          %279 = dma.done %s272, 2048
        $region44: #{tpu_custom_call.1} parent=39 // pred_fallthru
          _
        // Predicated region
        $region45: #{tpu_custom_call.1} parent=39 // pred_check
          %p280 = pneg %p108
        $region46: #{tpu_custom_call.1} parent=39 // pred_check_branch
          %282 = sbr.rel (%p280) target = $region48
        $region47: #{tpu_custom_call.1} parent=39 // pred_region
          %283 = dma.done [#allocation7], 2560
        $region48: #{tpu_custom_call.1} parent=39 // pred_fallthru
          _
        %p284 = scmp.lt.s32.totalorder %s28, 1
        %s285 = scalar_select %p284, %s28, 1
        %s286 = smul.addr %s285, 8
        %s287 = scalar_lea.vmem %s0, %s286
        %p288 = pneg %p56
        %p289 = pneg %p53
        %s290 = sand.u32 %s69, 1
        %s291 = scalar_lea.sflag [#allocation4], %s290
        %s292 = sand.u32 %s69, 1
        %s293 = smul.addr %s292, 128
        %s294 = scalar_lea.vmem [#allocation3], %s293
        %p295 = pneg %p82
        %p296 = pneg %p79
        %p297 = pneg %p108
        %p298 = pneg %p105
        %p299 = scmp.lt.s32.totalorder %s28, 1
        %s300 = scalar_select %p299, %s28, 1
        %s301 = smul.addr %s300, 8
        %s302 = scalar_lea.vmem %s3, %s301
        %p303 = pneg %p134
        %p304 = pneg %p131
        %p305 = scmp.lt.s32.totalorder %s28, 1
        %s306 = scalar_select %p305, %s28, 1
        %s307 = scalar_lea.vmem %s4, %s306
        %p308 = pneg %p160
        %p309 = pneg %p157
        %p310 = pneg %p188
        %p311 = pneg %p185
        %s312 = sand.u32 %s175, 1
        %s313 = scalar_lea.sflag [#allocation5], %s312
        %s314 = sand.u32 %s175, 1
        %s315 = smul.addr %s314, 32
        %s316 = scalar_lea.vmem [#allocation8], %s315
        %p317 = scmp.lt.s32.totalorder %s28, 1
        %s318 = scalar_select %p317, %s28, 1
        %s319 = smul.addr %s318, 8
        %s320 = scalar_lea.vmem %s0, %s319
        %p321 = scmp.lt.s32.totalorder %s28, 1
        %s322 = scalar_select %p321, %s28, 1
        %s323 = smul.addr %s322, 8
        %s324 = scalar_lea.vmem %s3, %s323
        %p325 = scmp.lt.s32.totalorder %s28, 1
        %s326 = scalar_select %p325, %s28, 1
        %s327 = scalar_lea.vmem %s4, %s326
        %s328 = smul.u32 4, %s27
        %v329 = vld [vmem:[%s320] sm:$0xff]
        %v330 = vld [vmem:[%s275] sm:$0xff]
        %v331 = vld [vmem:[%s275 + $0x8] sm:$0xff]
        %v332 = vld [vmem:[%s275 + $0x10] sm:$0xff]
        %v333 = vld [vmem:[%s275 + $0x18] sm:$0xff]
        %v334 = vld [vmem:[%s275 + $0x20] sm:$0xff]
        %v335 = vld [vmem:[%s275 + $0x28] sm:$0xff]
        %v336 = vld [vmem:[%s275 + $0x30] sm:$0xff]
        %v337 = vld [vmem:[%s275 + $0x38] sm:$0xff]
        %v338 = vld [vmem:[%s275 + $0x40] sm:$0xff]
        %v339 = vld [vmem:[%s275 + $0x48] sm:$0xff]
        %v340 = vld [vmem:[%s275 + $0x50] sm:$0xff]
        %v341 = vld [vmem:[%s275 + $0x58] sm:$0xff]
        %v342 = vld [vmem:[%s275 + $0x60] sm:$0xff]
        %v343 = vld [vmem:[%s275 + $0x68] sm:$0xff]
        %v344 = vld [vmem:[%s275 + $0x70] sm:$0xff]
        %v345 = vld [vmem:[%s275 + $0x78] sm:$0xff]
        %v346 = vld [vmem:[#allocation6] sm:$0xff]
        %v347 = vld [vmem:[#allocation6 + $0x8] sm:$0xff]
        %v348 = vld [vmem:[#allocation6 + $0x10] sm:$0xff]
        %v349 = vld [vmem:[#allocation6 + $0x18] sm:$0xff]
        %v350 = vld [vmem:[#allocation6 + $0x20] sm:$0xff]
        %v351 = vld [vmem:[#allocation6 + $0x28] sm:$0xff]
        %v352 = vld [vmem:[#allocation6 + $0x30] sm:$0xff]
        %v353 = vld [vmem:[#allocation6 + $0x38] sm:$0xff]
        %v354 = vld [vmem:[#allocation6 + $0x40] sm:$0xff]
        %v355 = vld [vmem:[#allocation6 + $0x48] sm:$0xff]
        %v356 = vld [vmem:[#allocation6 + $0x50] sm:$0xff]
        %v357 = vld [vmem:[#allocation6 + $0x58] sm:$0xff]
        %v358 = vld [vmem:[#allocation6 + $0x60] sm:$0xff]
        %v359 = vld [vmem:[#allocation6 + $0x68] sm:$0xff]
        %v360 = vld [vmem:[#allocation6 + $0x70] sm:$0xff]
        %v361 = vld [vmem:[#allocation6 + $0x78] sm:$0xff]
        %v362 = vld [vmem:[#allocation6 + $0x80] sm:$0xff]
        %v363 = vld [vmem:[#allocation6 + $0x88] sm:$0xff]
        %v364 = vld [vmem:[#allocation6 + $0x90] sm:$0xff]
        %v365 = vld [vmem:[#allocation6 + $0x98] sm:$0xff]
        %vm366 = vcmask 326656
        %v368 = vsel %vm366, %v329, 0
        %370 = vmatprep.subr.mxu0 %v347
        %371 = vmatpush1.msra.mxu0 %v346
        %372 = vmatprep.subr.mxu0 %v351
        %373 = vmatpush1.msra.mxu0 %v350
        %374 = vmatprep.subr.mxu0 %v355
        %375 = vmatpush1.msra.mxu0 %v354
        %376 = vmatprep.subr.mxu0 %v359
        %377 = vmatpush1.msra.mxu0 %v358
        %378 = vmatprep.subr.mxu0 %v363
        %379 = vmatpush1.msra.mxu0 %v362
        %380 = vmatprep.subr.mxu0 0.0
        %381 = vmatpush1.msra.mxu0 0.0
        %382 = vmatprep.subr.mxu0 0.0
        %383 = vmatpush1.msra.mxu0 0.0
        %384 = vmatprep.subr.mxu0 0.0
        %385 = vmatpush1.msra.mxu0 0.0
        %386 = vmatprep.subr.mxu0 0.0
        %387 = vmatpush1.msra.mxu0 0.0
        %388 = vmatprep.subr.mxu0 0.0
        %389 = vmatpush1.msra.mxu0 0.0
        %390 = vmatprep.subr.mxu0 0.0
        %391 = vmatpush1.msra.mxu0 0.0
        %392 = vmatprep.subr.mxu0 0.0
        %393 = vmatpush1.msra.mxu0 0.0
        %394 = vmatprep.subr.mxu0 0.0
        %395 = vmatpush1.msra.mxu0 0.0
        %396 = vmatprep.subr.mxu0 0.0
        %397 = vmatpush1.msra.mxu0 0.0
        %398 = vmatprep.subr.mxu0 0.0
        %399 = vmatpush1.msra.mxu0 0.0
        %400 = vmatprep.subr.mxu0 0.0
        %401 = vmatpush1.msra.mxu0 0.0
        %402 = vmatprep.subr.mxu0 0.0
        %403 = vmatpush1.msra.mxu0 0.0
        %404 = vmatprep.subr.mxu0 0.0
        %405 = vmatpush1.msra.mxu0 0.0
        %406 = vmatprep.subr.mxu0 0.0
        %407 = vmatpush1.msra.mxu0 0.0
        %408 = vmatprep.subr.mxu0 0.0
        %409 = vmatpush1.msra.mxu0 0.0
        %410 = vmatprep.subr.mxu0 0.0
        %411 = vmatpush1.msra.mxu0 0.0
        %412 = vmatprep.subr.mxu0 0.0
        %413 = vmatpush1.msra.mxu0 0.0
        %414 = vmatprep.subr.mxu0 0.0
        %415 = vmatpush1.msra.mxu0 0.0
        %416 = vmatprep.subr.mxu0 0.0
        %417 = vmatpush1.msra.mxu0 0.0
        %418 = vmatprep.subr.mxu0 0.0
        %419 = vmatpush1.msra.mxu0 0.0
        %420 = vmatprep.subr.mxu0 0.0
        %421 = vmatpush1.msra.mxu0 0.0
        %422 = vmatprep.subr.mxu0 0.0
        %423 = vmatpush1.msra.mxu0 0.0
        %424 = vmatprep.subr.mxu0 0.0
        %425 = vmatpush1.msra.mxu0 0.0
        %426 = vmatprep.subr.mxu0 0.0
        %427 = vmatpush1.msra.mxu0 0.0
        %428 = vmatprep.subr.mxu0 0.0
        %429 = vmatpush1.msra.mxu0 0.0
        %430 = vmatprep.subr.mxu0 0.0
        %431 = vmatpush1.msra.mxu0 0.0
        %432 = vmatprep.subr.mxu0 0.0
        %433 = vmatpush1.msra.mxu0 0.0
        %434 = vmatprep.mubr.f32.mxu0 0.0
        %435 = vmatmul.mubr.f32.gmra.mrb[0].mxu0 %v368
        %v436 = vpop.f32.mrb[0].mxu0
        %v437 = vadd.f32 0.0, %v436
        %v438 = vpop.f32.mrb[0].mxu0
        %v439 = vadd.f32 0.0, %v438
        %440 = vdwg.mxu0
        %441 = vmatprep.subr.mxu0 %v349
        %442 = vmatpush1.msra.mxu0 %v348
        %443 = vmatprep.subr.mxu0 %v353
        %444 = vmatpush1.msra.mxu0 %v352
        %445 = vmatprep.subr.mxu0 %v357
        %446 = vmatpush1.msra.mxu0 %v356
        %447 = vmatprep.subr.mxu0 %v361
        %448 = vmatpush1.msra.mxu0 %v360
        %449 = vmatprep.subr.mxu0 %v365
        %450 = vmatpush1.msra.mxu0 %v364
        %451 = vmatprep.subr.mxu0 0.0
        %452 = vmatpush1.msra.mxu0 0.0
        %453 = vmatprep.subr.mxu0 0.0
        %454 = vmatpush1.msra.mxu0 0.0
        %455 = vmatprep.subr.mxu0 0.0
        %456 = vmatpush1.msra.mxu0 0.0
        %457 = vmatprep.subr.mxu0 0.0
        %458 = vmatpush1.msra.mxu0 0.0
        %459 = vmatprep.subr.mxu0 0.0
        %460 = vmatpush1.msra.mxu0 0.0
        %461 = vmatprep.subr.mxu0 0.0
        %462 = vmatpush1.msra.mxu0 0.0
        %463 = vmatprep.subr.mxu0 0.0
        %464 = vmatpush1.msra.mxu0 0.0
        %465 = vmatprep.subr.mxu0 0.0
        %466 = vmatpush1.msra.mxu0 0.0
        %467 = vmatprep.subr.mxu0 0.0
        %468 = vmatpush1.msra.mxu0 0.0
        %469 = vmatprep.subr.mxu0 0.0
        %470 = vmatpush1.msra.mxu0 0.0
        %471 = vmatprep.subr.mxu0 0.0
        %472 = vmatpush1.msra.mxu0 0.0
        %473 = vmatprep.subr.mxu0 0.0
        %474 = vmatpush1.msra.mxu0 0.0
        %475 = vmatprep.subr.mxu0 0.0
        %476 = vmatpush1.msra.mxu0 0.0
        %477 = vmatprep.subr.mxu0 0.0
        %478 = vmatpush1.msra.mxu0 0.0
        %479 = vmatprep.subr.mxu0 0.0
        %480 = vmatpush1.msra.mxu0 0.0
        %481 = vmatprep.subr.mxu0 0.0
        %482 = vmatpush1.msra.mxu0 0.0
        %483 = vmatprep.subr.mxu0 0.0
        %484 = vmatpush1.msra.mxu0 0.0
        %485 = vmatprep.subr.mxu0 0.0
        %486 = vmatpush1.msra.mxu0 0.0
        %487 = vmatprep.subr.mxu0 0.0
        %488 = vmatpush1.msra.mxu0 0.0
        %489 = vmatprep.subr.mxu0 0.0
        %490 = vmatpush1.msra.mxu0 0.0
        %491 = vmatprep.subr.mxu0 0.0
        %492 = vmatpush1.msra.mxu0 0.0
        %493 = vmatprep.subr.mxu0 0.0
        %494 = vmatpush1.msra.mxu0 0.0
        %495 = vmatprep.subr.mxu0 0.0
        %496 = vmatpush1.msra.mxu0 0.0
        %497 = vmatprep.subr.mxu0 0.0
        %498 = vmatpush1.msra.mxu0 0.0
        %499 = vmatprep.subr.mxu0 0.0
        %500 = vmatpush1.msra.mxu0 0.0
        %501 = vmatprep.subr.mxu0 0.0
        %502 = vmatpush1.msra.mxu0 0.0
        %503 = vmatprep.subr.mxu0 0.0
        %504 = vmatpush1.msra.mxu0 0.0
        %505 = vmatprep.mubr.f32.mxu0 0.0
        %506 = vmatmul.mubr.f32.gmra.mrb[0].mxu0 %v368
        %v507 = vpop.f32.mrb[0].mxu0
        %v508 = vadd.f32 0.0, %v507
        %v509 = vpop.f32.mrb[0].mxu0
        %v510 = vadd.f32 0.0, %v509
        %511 = vdwg.mxu0
        %512 = vst [vmem:[#allocation2] sm:$0xff] %v437
        %513 = vst [vmem:[#allocation2 + $0x8] sm:$0xff] %v439
        %514 = vst [vmem:[#allocation2 + $0x10] sm:$0xff] %v508
        %515 = vst [vmem:[#allocation2 + $0x18] sm:$0xff] %v510
        loop: start=0, step=1, limit=4
        $region49: #{tpu_custom_call.1} parent=39 // loop_pre_header
          _
        $region50: #{tpu_custom_call.1} parent=39 // loop_header
          %s517 = sphi 0, %s521
          %p518 = scmp.ge.s32.totalorder %s517, 4
        $region51: #{tpu_custom_call.1} parent=39 // loop_header_branch
          %520 = sbr.rel (%p518) target = $region55
        $region52: #{tpu_custom_call.1} parent=39 // loop_body
          %s522 = smul.u32 %s517, 128
          %s523 = sshra.s32 %s522, 7
          %s524 = sand.u32 %s522, 127
          %s525 = smul.addr %s523, 8
          %s526 = scalar_lea.vmem [#allocation2], %s525
          %v527 = vld [vmem:[%s526] sm:$0xff]
          %528 = vmatprep.subr.mxu0 0.0
          %529 = vmatpush1.msra.mxu0 %v330
          %530 = vmatprep.subr.mxu0 0.0
          %531 = vmatpush1.msra.mxu0 %v331
          %532 = vmatprep.subr.mxu0 0.0
          %533 = vmatpush1.msra.mxu0 %v332
          %534 = vmatprep.subr.mxu0 0.0
          %535 = vmatpush1.msra.mxu0 %v333
          %536 = vmatprep.subr.mxu0 0.0
          %537 = vmatpush1.msra.mxu0 %v334
          %538 = vmatprep.subr.mxu0 0.0
          %539 = vmatpush1.msra.mxu0 %v335
          %540 = vmatprep.subr.mxu0 0.0
          %541 = vmatpush1.msra.mxu0 %v336
          %542 = vmatprep.subr.mxu0 0.0
          %543 = vmatpush1.msra.mxu0 %v337
          %544 = vmatprep.subr.mxu0 0.0
          %545 = vmatpush1.msra.mxu0 %v338
          %546 = vmatprep.subr.mxu0 0.0
          %547 = vmatpush1.msra.mxu0 %v339
          %548 = vmatprep.subr.mxu0 0.0
          %549 = vmatpush1.msra.mxu0 %v340
          %550 = vmatprep.subr.mxu0 0.0
          %551 = vmatpush1.msra.mxu0 %v341
          %552 = vmatprep.subr.mxu0 0.0
          %553 = vmatpush1.msra.mxu0 %v342
          %554 = vmatprep.subr.mxu0 0.0
          %555 = vmatpush1.msra.mxu0 %v343
          %556 = vmatprep.subr.mxu0 0.0
          %557 = vmatpush1.msra.mxu0 %v344
          %558 = vmatprep.subr.mxu0 0.0
          %559 = vmatpush1.msra.mxu0 %v345
          %560 = vmatprep.subr.mxu0 0.0
          %561 = vmatpush1.msra.mxu0 0.0
          %562 = vmatprep.subr.mxu0 0.0
          %563 = vmatpush1.msra.mxu0 0.0
          %564 = vmatprep.subr.mxu0 0.0
          %565 = vmatpush1.msra.mxu0 0.0
          %566 = vmatprep.subr.mxu0 0.0
          %567 = vmatpush1.msra.mxu0 0.0
          %568 = vmatprep.subr.mxu0 0.0
          %569 = vmatpush1.msra.mxu0 0.0
          %570 = vmatprep.subr.mxu0 0.0
          %571 = vmatpush1.msra.mxu0 0.0
          %572 = vmatprep.subr.mxu0 0.0
          %573 = vmatpush1.msra.mxu0 0.0
          %574 = vmatprep.subr.mxu0 0.0
          %575 = vmatpush1.msra.mxu0 0.0
          %576 = vmatprep.subr.mxu0 0.0
          %577 = vmatpush1.msra.mxu0 0.0
          %578 = vmatprep.subr.mxu0 0.0
          %579 = vmatpush1.msra.mxu0 0.0
          %580 = vmatprep.subr.mxu0 0.0
          %581 = vmatpush1.msra.mxu0 0.0
          %582 = vmatprep.subr.mxu0 0.0
          %583 = vmatpush1.msra.mxu0 0.0
          %584 = vmatprep.subr.mxu0 0.0
          %585 = vmatpush1.msra.mxu0 0.0
          %586 = vmatprep.subr.mxu0 0.0
          %587 = vmatpush1.msra.mxu0 0.0
          %588 = vmatprep.subr.mxu0 0.0
          %589 = vmatpush1.msra.mxu0 0.0
          %590 = vmatprep.subr.mxu0 0.0
          %591 = vmatpush1.msra.mxu0 0.0
          %592 = vmatprep.mubr.f32.mxu0 0.0
          %593 = vmatmul.mubr.f32.gmra.mrb[0].mxu0 %v527
          %v594 = vpop.f32.mrb[0].mxu0
          %v595 = vadd.f32 0.0, %v594
          %v596 = vpop.f32.mrb[0].mxu0
          %597 = vdwg.mxu0
          %v598 = vld [vmem:[%s324] sm:$0xff]
          %600 = vset.pattern.permute.xlu0 0
          %601 = vperm.xlu0 %600, %v598
          %v602 = vpop.permute.xlu0 %601
          %v604 = vmul.f32 %v595, %v602
          %v605 = vld [vmem:[%s327] sm:$0x1]
          %v607 = vlaneseq
          %v608 = vshrl.u32 %v607, 7
          %v609 = vsub.s32 0, %v608
          %v610 = vrot.slane %v605, %v609
          %v612 = vmul.f32 %v604, %v610
          %s613 = smul.u32 %s517, 8
          %s614 = scalar_lea.vmem %s316, %s613 [#allocation8]
          %615 = vst [vmem:[%s614] sm:$0xff] %v612
        $region53: #{tpu_custom_call.1} parent=39 // loop_footer
          %s521 = sadd.s32 1, %s517
        $region54: #{tpu_custom_call.1} parent=39 // loop_footer_branch
          %516 = sbr.rel target = $region50
        $region55: #{tpu_custom_call.1} parent=39 // loop_exit
          _
        %s616 = sand.u32 %s175, 1
        %s617 = scalar_lea.sflag [#allocation5], %s616
        %s618 = sand.u32 %s175, 1
        %s619 = smul.addr %s618, 32
        %s620 = scalar_lea.vmem [#allocation8], %s619
        // Predicated region
        $region56: #{tpu_custom_call.1} parent=39 // pred_check
          %p621 = pneg %p185
        $region57: #{tpu_custom_call.1} parent=39 // pred_check_branch
          %623 = sbr.rel (%p621) target = $region59
        $region58: #{tpu_custom_call.1} parent=39 // pred_region
          %s624 = smul.u32 4, %s27
          %s626 = ssub.s32 512, 512
          %627 = vsyncadd %s617, %s626
          %s628 = smul.addr %s28, 4
          %s629 = sadd.s32 %s624, %s628
          %s630 = smul.addr %s629, 128
          %s631 = scalar_lea.hbm %s5, %s630
          %s632 = sshll.u32 %s620, 4
          %s633 = int_to_ptr.vmem [resolvable:$true] %s632
          %638 = dma.vmem_to_hbm [thread:$0]  %s633, 512, %s631, %s617, 128, 128, 8
        $region59: #{tpu_custom_call.1} parent=39 // pred_fallthru
          _
      $region40: #{tpu_custom_call.1} parent=5 // pred_fallthru
        _
      %p639 = scmp.le.s32.totalorder 2, %s18
      // Predicated region
      $region60: #{tpu_custom_call.1} parent=5 // pred_check
        %p640 = pneg %p639
      $region61: #{tpu_custom_call.1} parent=5 // pred_check_branch
        %642 = sbr.rel (%p640) target = $region63
      $region62: #{tpu_custom_call.1} parent=5 // pred_region
        %s643 = ssub.s32 %s18, 2
        // Predicated region
        $region64: #{tpu_custom_call.1} parent=62 // pred_check
          %p644 = pneg %p191
        $region65: #{tpu_custom_call.1} parent=62 // pred_check_branch
          %646 = sbr.rel (%p644) target = $region67
        $region66: #{tpu_custom_call.1} parent=62 // pred_region
          %s647 = sand.u32 %s176, 1
          %s648 = scalar_lea.sflag [#allocation5], %s647
          %s649 = sand.u32 %s176, 1
          %s650 = smul.addr %s649, 32
          %s651 = scalar_lea.vmem [#allocation8], %s650
          %652 = dma.done %s648, 512
        $region67: #{tpu_custom_call.1} parent=62 // pred_fallthru
          _
      $region63: #{tpu_custom_call.1} parent=5 // pred_fallthru
        _
    $region6: #{tpu_custom_call.1} parent=1 // loop_footer
      %s22 = sadd.s32 1, %s18
    $region7: #{tpu_custom_call.1} parent=1 // loop_footer_branch
      %17 = sbr.rel target = $region3
    $region8: #{tpu_custom_call.1} parent=1 // loop_exit
      _
    %653 = vsyncpa [#allocation4], 1
    %s654 = scalar_lea.sflag [#allocation4], 1
    %655 = vsyncpa %s654, 1
    %656 = vsyncpa [#allocation7], 1
    %657 = vsyncpa [#allocation5], 1
    %s658 = scalar_lea.sflag [#allocation5], 1
    %659 = vsyncpa %s658, 1

</llo_original>
